<compile_context>
chip_gen: v6e
topology: v6e:2x2x1
jax: 0.10.0
libtpu: 0.0.40
codegen_flags: <defaults>
</compile_context>

<pallas_src>
import functools

import numpy as np
import jax
import jax.numpy as jnp
from jax.experimental import pallas as pl
from jax.experimental.pallas import tpu as pltpu


def _residual_add_kernel(x_ref, s_ref, o_ref):
    # (block_rows, lane) tiles in VMEM -> one full-width VPU add per tile.
    o_ref[...] = x_ref[...] + s_ref[...]


def _per_operand_tile_budget_bytes():
    """Per-generation per-operand VMEM tile budget (bytes)."""
    try:
        info = pltpu.get_tpu_info()
        vmem = int(getattr(info, "vmem_capacity_bytes", 64 << 20))
    except Exception:
        vmem = 64 << 20  # conservative default: v7x per-TensorCore VMEM
    # 3 operands x 2 pipeline buffers per step must fit comfortably in VMEM:
    # 128 MiB chips (v5e/v6e) -> 8 MiB tiles, 64 MiB (v7x) -> 4 MiB tiles.
    return int(min(8 << 20, max(2 << 20, vmem // 16)))


def _pick_lane_and_pad(total):
    """Largest lane width in {1024,512,256,128} dividing the (padded) size."""
    for lane in (1024, 512, 256, 128):
        if total % lane == 0:
            return lane, 0
    # Awkward sizes: pad the flattened array up to a multiple of 8*128 so every
    # vld/vst stays full-width (no masked partial stores); slice afterwards.
    padded = ((total + 1023) // 1024) * 1024
    return 128, padded - total


def _pick_block_rows(rows, lane, itemsize, total_bytes, per_operand_budget):
    if rows < 16:
        return rows  # single full-extent block (always legal)
    target = max(8, (per_operand_budget // (lane * itemsize)) // 8 * 8)
    # For >=1 MiB tensors use at least 2 blocks so dimension_semantics
    # ("parallel",) can shard the grid across both TensorCores on v7x
    # (and megacore on v5e/v6e).
    min_blocks = 2 if total_bytes >= (1 << 20) else 1
    upper = min(target, rows // min_blocks)
    upper = max(8, (upper // 8) * 8)
    # Prefer a divisor of `rows`: no ragged tail -> no masked vst on last step.
    for br in range(upper, 7, -8):
        if rows % br == 0:
            return br
    return upper  # ragged tail handled correctly by the cdiv grid


def residual_connection(x, sublayer_out, *, donate_x=False):
    """y = x + sublayer_out (same shape) via a tiled, lane-dense Pallas kernel."""
    assert x.shape == sublayer_out.shape, (x.shape, sublayer_out.shape)
    out_dtype = jnp.result_type(x.dtype, sublayer_out.dtype)
    itemsize = np.dtype(out_dtype).itemsize

    orig_shape = x.shape
    total = x.size

    xf = x.astype(out_dtype).reshape(-1)
    sf = sublayer_out.astype(out_dtype).reshape(-1)

    lane, pad = _pick_lane_and_pad(total)
    if pad:
        xf = jnp.pad(xf, (0, pad))
        sf = jnp.pad(sf, (0, pad))
    rows = (total + pad) // lane
    xf = xf.reshape(rows, lane)
    sf = sf.reshape(rows, lane)

    total_bytes = rows * lane * itemsize
    block_rows = _pick_block_rows(rows, lane, itemsize, total_bytes,
                                  _per_operand_tile_budget_bytes())
    grid = (pl.cdiv(rows, block_rows),)

    tile_bytes = block_rows * lane * itemsize
    # 3 operands x 2 pipeline buffers + headroom; kept under v7x's 64 MiB VMEM,
    # and explicitly raised above v5e's 16 MiB scoped default.
    vmem_limit = int(min(56 << 20, max(32 << 20, 6 * tile_bytes + (2 << 20))))

    alias = {}
    if donate_x and pad == 0 and x.dtype == out_dtype:
        alias = {0: 0}  # reuse x's HBM buffer as the output buffer

    out = pl.pallas_call(
        _residual_add_kernel,
        out_shape=jax.ShapeDtypeStruct((rows, lane), out_dtype),
        grid=grid,
        in_specs=[
            pl.BlockSpec((block_rows, lane), lambda r: (r, 0)),
            pl.BlockSpec((block_rows, lane), lambda r: (r, 0)),
        ],
        out_specs=pl.BlockSpec((block_rows, lane), lambda r: (r, 0)),
        input_output_aliases=alias,
        compiler_params=pltpu.CompilerParams(
            dimension_semantics=("parallel",),
            vmem_limit_bytes=vmem_limit,
        ),
    )(xf, sf)

    out = out.reshape(-1)
    if pad:
        out = out[:total]
    return out.reshape(orig_shape)


def connection_forward(x, sublayer, *, donate_x=False, fuse_with_xla=False):
    """Connection.forward: y = x + sublayer(x).

    If `fuse_with_xla=True`, the add is emitted as a plain jnp op so XLA fuses
    it into the sublayer's epilogue (zero extra HBM round trip) -- best choice
    when the sublayer is ordinary XLA code.  Otherwise the residual add runs
    through the Pallas kernel above.
    """
    s = sublayer(x)
    if fuse_with_xla:
        return x + s
    # TODO(synk): when the sublayer is itself a Pallas/matmul kernel, fuse the
    # residual add into its finalize step (extra BlockSpec carrying x) to avoid
    # the sublayer_out HBM write + re-read; not expressible generically for an
    # arbitrary Python callable.
    return residual_connection(x, s, donate_x=donate_x)


if __name__ == "__main__":
    key = jax.random.PRNGKey(0)
    N, C, H, W = 2, 4, 16, 16
    kx, kw = jax.random.split(key)
    x = jax.random.normal(kx, (N, C, H, W), jnp.float32)

    # Example sublayer (the module accepts an arbitrary callable): a 1x1
    # channel-mixing "conv" preserving the shape, evaluated in plain JAX.
    w = jax.random.normal(kw, (C, C), jnp.float32) * 0.1

    def sublayer(z):
        return jnp.einsum("oc,nchw->nohw", w, z)

    # Pure-JAX reference for Connection.forward (computed before x is donated).
    ref = x + sublayer(x)

    fwd = jax.jit(
        functools.partial(connection_forward, sublayer=sublayer, donate_x=True),
        donate_argnums=(0,),
    )
    out = jax.block_until_ready(fwd(x))

    assert out.shape == ref.shape
    assert jnp.allclose(out, ref, atol=1e-6, rtol=1e-6)
    print("KERNEL_OK")
</pallas_src>

<mosaic_0001>
module attributes {stable_mosaic.version = 11 : i64} {
  func.func @_residual_add_kernel(%arg0: i32, %arg1: memref<2x1024xf32, #tpu.memory_space<vmem>>, %arg2: memref<2x1024xf32, #tpu.memory_space<vmem>>, %arg3: memref<2x1024xf32, #tpu.memory_space<vmem>>) attributes {dimension_semantics = [#tpu.dimension_semantics<parallel>], iteration_bounds = array<i64: 1>, scalar_prefetch = 0 : i64, scratch_operands = 0 : i64, tpu.core_type = #tpu.core_type<tc>, window_params = [{transform_indices = @transform_0, window_bounds = array<i64: 2, 1024>}, {transform_indices = @transform_1, window_bounds = array<i64: 2, 1024>}, {transform_indices = @transform_2, window_bounds = array<i64: 2, 1024>}]} {
    %c0 = arith.constant 0 : index
    %c0_0 = arith.constant 0 : index
    %0 = vector.load %arg1[%c0, %c0_0] : memref<2x1024xf32, #tpu.memory_space<vmem>>, vector<2x1024xf32>
    %c0_1 = arith.constant 0 : index
    %c0_2 = arith.constant 0 : index
    %1 = vector.load %arg2[%c0_1, %c0_2] : memref<2x1024xf32, #tpu.memory_space<vmem>>, vector<2x1024xf32>
    %2 = arith.addf %0, %1 : vector<2x1024xf32>
    %c0_3 = arith.constant 0 : index
    %c0_4 = arith.constant 0 : index
    %3 = vector.load %arg3[%c0_3, %c0_4] : memref<2x1024xf32, #tpu.memory_space<vmem>>, vector<2x1024xf32>
    tpu.vector_store %arg3[%c0_3, %c0_4], %2 {strides = array<i32>} : memref<2x1024xf32, #tpu.memory_space<vmem>>, vector<2x1024xf32>,
    return
  }
  func.func @transform_0(%arg0: i32) -> (i32, i32) {
    %c0_i32 = arith.constant 0 : i32
    %c0_i32_0 = arith.constant 0 : i32
    return %arg0, %c0_i32 : i32, i32
  }
  func.func @transform_1(%arg0: i32) -> (i32, i32) {
    %c0_i32 = arith.constant 0 : i32
    %c0_i32_0 = arith.constant 0 : i32
    return %arg0, %c0_i32 : i32, i32
  }
  func.func @transform_2(%arg0: i32) -> (i32, i32) {
    %c0_i32 = arith.constant 0 : i32
    %c0_i32_0 = arith.constant 0 : i32
    return %arg0, %c0_i32 : i32, i32
  }
}

</mosaic_0001>

<llo_original>
// kernel: connection_forward.1
$region0: #{connection_forward.1}
  #allocation0 [shape = 'u32[]', space=smem, size = 0x4, offset = 0x4, fixed_abs, tag = 'smem constant byte address 0x4 - core index']
  #allocation1 [shape = 'u32[144,128]{1,0:T(1,128)}', space=vmem, size = 0x12000, scoped, tag = 'internal scratch']
  %s0 = inlined_call_operand.vmem [shape: f32[2,1024], index: 0, kind: input, shape index: {}, may-alias: {0,2}]
  %s1 = inlined_call_operand.vmem [shape: f32[2,1024], index: 1, kind: input, shape index: {}]
  %s2 = inlined_call_operand.vmem [shape: f32[2,1024], index: 2, kind: output, shape index: {}, may-alias: {0,2}]
  %s3 = sld [smem:[#allocation0]]
  $region18: #{connection_forward.1} parent=0
    _
  %s5 = ssub.s32 1, %s3
  %s6 = scalar_select 0, %s5, %s3
  // Predicated region
  $region2: #{connection_forward.1} parent=0 // pred_check
    _
  $region3: #{connection_forward.1} parent=0 // pred_check_branch
    %8 = sbr.rel (0) target = $region5
  $region4: #{connection_forward.1} parent=0 // pred_region
    _
  $region5: #{connection_forward.1} parent=0 // pred_fallthru
    _
  // Predicated region
  $region6: #{connection_forward.1} parent=0 // pred_check
    _
  $region7: #{connection_forward.1} parent=0 // pred_check_branch
    %10 = sbr.rel (0) target = $region9
  $region8: #{connection_forward.1} parent=0 // pred_region
    _
  $region9: #{connection_forward.1} parent=0 // pred_fallthru
    _
  %v11 = vld [vmem:[%s0] sm:$0xff]
  %v12 = vld [vmem:[%s0 + $0x8] sm:$0xff]
  %v13 = vld [vmem:[%s1] sm:$0xff]
  %v14 = vld [vmem:[%s1 + $0x8] sm:$0xff]
  %v15 = vadd.f32 %v11, %v13
  %v16 = vadd.f32 %v12, %v14
  %17 = vst [vmem:[%s2] sm:$0xff] %v15
  %18 = vst [vmem:[%s2 + $0x8] sm:$0xff] %v16
  // Predicated region
  $region10: #{connection_forward.1} parent=0 // pred_check
    _
  $region11: #{connection_forward.1} parent=0 // pred_check_branch
    %20 = sbr.rel (0) target = $region13
  $region12: #{connection_forward.1} parent=0 // pred_region
    _
  $region13: #{connection_forward.1} parent=0 // pred_fallthru
    _
  // Predicated region
  $region14: #{connection_forward.1} parent=0 // pred_check
    _
  $region15: #{connection_forward.1} parent=0 // pred_check_branch
    %22 = sbr.rel (0) target = $region17
  $region16: #{connection_forward.1} parent=0 // pred_region
    _
  $region17: #{connection_forward.1} parent=0 // pred_fallthru
    _

</llo_original>
